<compile_context>
chip_gen: v5e
topology: v5e:2x2
jax: 0.10.0
libtpu: 0.0.40
codegen_flags: <defaults>
</compile_context>

<pallas_src>
import functools

import jax
import jax.numpy as jnp
from jax.experimental import pallas as pl
from jax.experimental.pallas import tpu as pltpu


def _round_up(x, m):
    return ((x + m - 1) // m) * m


# ----------------------------------------------------------------------------
# Pallas kernel: fused (actor || critic) MLP + masked softmax, packed output
# ----------------------------------------------------------------------------
def _worker_ac_kernel(xg_ref, w1_ref, w2_ref, w3_ref, b_ref, out_ref, *,
                      action_dim, p1, p2, p3):
    xg = xg_ref[...]            # bf16 (tile_b, obs_dim+goal_dim)
    b = b_ref[...]              # f32  (8, 128) packed biases (rows 0/1/2 used)

    # layer 1: single K=32 bf16 matmul; actor in lanes [0, h1a), critic next.
    h = jnp.dot(xg, w1_ref[...], preferred_element_type=jnp.float32)
    h = jnp.maximum(h + b[0:1, :p1], 0.0)

    # layer 2: block-diagonal (actor / critic) weights, one 128-wide bf16 matmul.
    h = jnp.dot(h.astype(jnp.bfloat16), w2_ref[...],
                preferred_element_type=jnp.float32)
    h = jnp.maximum(h + b[1:2, :p2], 0.0)

    # heads: actor logits in lanes [0, action_dim), critic value in lane
    # action_dim, zeros elsewhere (128-lane-dense output slab).
    z = (jnp.dot(h.astype(jnp.bfloat16), w3_ref[...],
                 preferred_element_type=jnp.float32) + b[2:3, :p3])

    # masked softmax over the action lanes only; value lane passes through.
    lane = jax.lax.broadcasted_iota(jnp.int32, z.shape, 1)
    is_act = lane < action_dim
    logits = jnp.where(is_act, z, jnp.float32(-1e30))
    m = jnp.max(logits, axis=-1, keepdims=True)
    e = jnp.where(is_act, jnp.exp(logits - m), 0.0)
    denom = jnp.sum(e, axis=-1, keepdims=True)
    probs = e * pl.reciprocal(denom, approx=True)      # EUP slot, ~free
    out_ref[...] = jnp.where(lane == action_dim, z, probs).astype(out_ref.dtype)


# ----------------------------------------------------------------------------
# Wrapper
# ----------------------------------------------------------------------------
_TILE_CAP = 2048          # VMEM use at 2048 rows is still only a few MiB
_MIN_SPLIT = 512          # split into >=2 grid steps past this (v7x 2 TCs)


def worker_actor_critic_forward(x, goal, packed):
    """Forward pass: returns (policy [B, action_dim], value [B, 1])."""
    dims = packed["dims"]
    obs_dim, goal_dim = dims["obs_dim"], dims["goal_dim"]
    action_dim = dims["action_dim"]
    p1, p2, p3 = dims["p1"], dims["p2"], dims["p3"]
    in_dim = obs_dim + goal_dim
    pb = packed["b"].shape[1]

    B = x.shape[0]
    # Single fused XLA op: concat + cast to bf16 (halves activation DMA and
    # lets layer 1 be one K=in_dim matmul inside the kernel).
    xg = jnp.concatenate([x, goal], axis=-1).astype(jnp.bfloat16)

    # Tile selection: ceil-split B to minimize padding, cap per-tile rows, and
    # keep >= 2 grid steps for large batches so v7x's two TCs both get work.
    num_tiles = -(-B // _TILE_CAP)
    if num_tiles == 1 and B >= _MIN_SPLIT:
        num_tiles = 2
    tile_b = _round_up(-(-B // num_tiles), 16)     # 16-aligned for bf16 sublanes
    b_pad = tile_b * num_tiles
    if b_pad != B:
        xg = jnp.pad(xg, ((0, b_pad - B), (0, 0)))

    kernel = functools.partial(_worker_ac_kernel, action_dim=action_dim,
                               p1=p1, p2=p2, p3=p3)

    out = pl.pallas_call(
        kernel,
        out_shape=jax.ShapeDtypeStruct((b_pad, p3), jnp.float32),
        grid=(num_tiles,),
        in_specs=[
            pl.BlockSpec((tile_b, in_dim), lambda i: (i, 0)),
            # weights / biases: constant index_map -> stay VMEM-resident.
            pl.BlockSpec((in_dim, p1), lambda i: (0, 0)),
            pl.BlockSpec((p1, p2), lambda i: (0, 0)),
            pl.BlockSpec((p2, p3), lambda i: (0, 0)),
            pl.BlockSpec((8, pb), lambda i: (0, 0)),
        ],
        out_specs=pl.BlockSpec((tile_b, p3), lambda i: (i, 0)),
        compiler_params=pltpu.CompilerParams(
            dimension_semantics=("parallel",)),   # batch axis shards over 2 TCs (v7x)
    )(xg, packed["w1"], packed["w2"], packed["w3"], packed["b"])

    # NOTE: consumers that can take the packed (B, 128) slab directly should,
    # to skip these two HBM-bound slice ops.
    policy = out[:B, :action_dim]
    value = out[:B, action_dim:action_dim + 1]
    return policy, value


# ----------------------------------------------------------------------------
# Parameter init (mirrors torch.nn.Linear default ranges) + lane-dense packing
# ----------------------------------------------------------------------------
def _init_linear(key, in_dim, out_dim):
    kw, kb = jax.random.split(key)
    bound = 1.0 / jnp.sqrt(jnp.float32(in_dim))
    w = jax.random.uniform(kw, (in_dim, out_dim), jnp.float32, -bound, bound)
    b = jax.random.uniform(kb, (1, out_dim), jnp.float32, -bound, bound)
    return w, b


def init_params(key, obs_dim, goal_dim, action_dim, hidden_dims=(64, 64)):
    combined = obs_dim + goal_dim
    keys = jax.random.split(key, 6)
    h1, h2 = hidden_dims
    actor = (
        _init_linear(keys[0], combined, h1),
        _init_linear(keys[1], h1, h2),
        _init_linear(keys[2], h2, action_dim),
    )
    critic = (
        _init_linear(keys[3], combined, h1),
        _init_linear(keys[4], h1, h2),
        _init_linear(keys[5], h2, 1),
    )
    return {"actor": actor, "critic": critic}


def pack_params(params, obs_dim, goal_dim, action_dim):
    """Pack actor+critic into 128-lane-wide fused / block-diagonal bf16 weights."""
    (aw1, ab1), (aw2, ab2), (aw3, ab3) = params["actor"]
    (cw1, cb1), (cw2, cb2), (cw3, cb3) = params["critic"]
    in_dim = obs_dim + goal_dim
    h1a, h1c = aw1.shape[1], cw1.shape[1]
    h2a, h2c = aw2.shape[1], cw2.shape[1]

    # NOTE: if hidden_dims ever grow past 128 combined, pad p1/p2 to 256 (v6e/v7x
    # MXU is 256-wide); with 64/64 hiddens 128 lanes is the right size.
    p1 = _round_up(h1a + h1c, 128)
    p2 = _round_up(h2a + h2c, 128)
    p3 = _round_up(action_dim + 1, 128)
    pbw = max(p1, p2, p3)

    # Layer 1: full (obs+goal) rows, actor || critic concatenated on lanes.
    w1 = jnp.zeros((in_dim, p1), jnp.float32)
    w1 = w1.at[:, :h1a].set(aw1).at[:, h1a:h1a + h1c].set(cw1)

    # Layer 2: block-diagonal.
    w2 = jnp.zeros((p1, p2), jnp.float32)
    w2 = w2.at[:h1a, :h2a].set(aw2).at[h1a:h1a + h1c, h2a:h2a + h2c].set(cw2)

    # Heads: actor -> lanes [0, action_dim), critic -> lane action_dim.
    w3 = jnp.zeros((p2, p3), jnp.float32)
    w3 = w3.at[:h2a, :action_dim].set(aw3)
    w3 = w3.at[h2a:h2a + h2c, action_dim:action_dim + 1].set(cw3)

    # All 6 biases packed into a single (8, pbw) f32 array (rows 0/1/2 used).
    b_all = jnp.zeros((8, pbw), jnp.float32)
    b_all = b_all.at[0, :h1a].set(ab1[0]).at[0, h1a:h1a + h1c].set(cb1[0])
    b_all = b_all.at[1, :h2a].set(ab2[0]).at[1, h2a:h2a + h2c].set(cb2[0])
    b_all = b_all.at[2, :action_dim].set(ab3[0])
    b_all = b_all.at[2, action_dim:action_dim + 1].set(cb3[0])

    return {
        "w1": w1.astype(jnp.bfloat16),
        "w2": w2.astype(jnp.bfloat16),
        "w3": w3.astype(jnp.bfloat16),
        "b": b_all,
        "dims": {"obs_dim": obs_dim, "goal_dim": goal_dim,
                 "action_dim": action_dim, "p1": p1, "p2": p2, "p3": p3},
    }


# ----------------------------------------------------------------------------
# Pure-JAX reference (for sanity checking)
# ----------------------------------------------------------------------------
def _reference_forward(x, goal, params):
    xg = jnp.concatenate([x, goal], axis=-1)

    def mlp(inp, layers):
        h = inp
        for i, (w, b) in enumerate(layers):
            h = h @ w + b
            if i < len(layers) - 1:
                h = jnp.maximum(h, 0.0)
        return h

    logits = mlp(xg, params["actor"])
    policy = jax.nn.softmax(logits, axis=-1)
    value = mlp(xg, params["critic"])
    return policy, value


if __name__ == "__main__":
    # Small shapes consistent with the module's forward.
    batch = 8
    obs_dim = 24
    goal_dim = 8
    action_dim = 16
    hidden_dims = (64, 64)

    key = jax.random.PRNGKey(0)
    k_obs, k_goal, k_params = jax.random.split(key, 3)

    x = jax.random.normal(k_obs, (batch, obs_dim), jnp.float32)
    goal = jax.random.normal(k_goal, (batch, goal_dim), jnp.float32)
    params = init_params(k_params, obs_dim, goal_dim, action_dim, hidden_dims)
    packed = pack_params(params, obs_dim, goal_dim, action_dim)

    fwd = jax.jit(functools.partial(worker_actor_critic_forward, packed=packed))
    policy, value = fwd(x, goal)
    jax.block_until_ready((policy, value))

    # Check against the plain-JAX f32 reference (bf16 MXU operands -> loose tol).
    ref_policy, ref_value = _reference_forward(x, goal, params)
    assert policy.shape == (batch, action_dim)
    assert value.shape == (batch, 1)
    assert jnp.allclose(policy, ref_policy, atol=2e-2, rtol=2e-2)
    assert jnp.allclose(value, ref_value, atol=2e-2, rtol=2e-2)
    assert jnp.allclose(jnp.sum(policy, axis=-1), 1.0, atol=5e-3)

    print("KERNEL_OK")
</pallas_src>

<mosaic_0001>
module attributes {stable_mosaic.version = 11 : i64} {
  func.func @_worker_ac_kernel(%arg0: i32, %arg1: memref<16x32xbf16, #tpu.memory_space<vmem>>, %arg2: memref<32x128xbf16, #tpu.memory_space<vmem>>, %arg3: memref<128x128xbf16, #tpu.memory_space<vmem>>, %arg4: memref<128x128xbf16, #tpu.memory_space<vmem>>, %arg5: memref<8x128xf32, #tpu.memory_space<vmem>>, %arg6: memref<16x128xf32, #tpu.memory_space<vmem>>) attributes {dimension_semantics = [#tpu.dimension_semantics<parallel>], iteration_bounds = array<i64: 1>, scalar_prefetch = 0 : i64, scratch_operands = 0 : i64, tpu.core_type = #tpu.core_type<tc>, window_params = [{transform_indices = @transform_0, window_bounds = array<i64: 16, 32>}, {pipeline_mode = #tpu.pipeline_mode<synchronous>, transform_indices = @transform_1, window_bounds = array<i64: 32, 128>}, {pipeline_mode = #tpu.pipeline_mode<synchronous>, transform_indices = @transform_2, window_bounds = array<i64: 128, 128>}, {pipeline_mode = #tpu.pipeline_mode<synchronous>, transform_indices = @transform_3, window_bounds = array<i64: 128, 128>}, {pipeline_mode = #tpu.pipeline_mode<synchronous>, transform_indices = @transform_4, window_bounds = array<i64: 8, 128>}, {transform_indices = @transform_5, window_bounds = array<i64: 16, 128>}]} {
    %c0 = arith.constant 0 : index
    %c0_0 = arith.constant 0 : index
    %0 = vector.load %arg1[%c0, %c0_0] : memref<16x32xbf16, #tpu.memory_space<vmem>>, vector<16x32xbf16>
    %c0_1 = arith.constant 0 : index
    %c0_2 = arith.constant 0 : index
    %1 = vector.load %arg5[%c0_1, %c0_2] : memref<8x128xf32, #tpu.memory_space<vmem>>, vector<8x128xf32>
    %c0_3 = arith.constant 0 : index
    %c0_4 = arith.constant 0 : index
    %2 = vector.load %arg2[%c0_3, %c0_4] : memref<32x128xbf16, #tpu.memory_space<vmem>>, vector<32x128xbf16>
    %cst = arith.constant dense<0.000000e+00> : vector<16x128xf32>
    %3 = tpu.matmul %0, %2, %cst {dimension_numbers = #tpu.dot_dimension_numbers<[1], [0], [0], [1], [0, 0, 1, 1], [], []>} : vector<16x32xbf16>, vector<32x128xbf16>, vector<16x128xf32> -> vector<16x128xf32>
    %4 = vector.extract_strided_slice %1 {offsets = [0, 0], sizes = [1, 128], strides = [1, 1]} : vector<8x128xf32> to vector<1x128xf32>
    %5 = vector.broadcast %4 : vector<1x128xf32> to vector<16x128xf32>
    %6 = arith.addf %3, %5 : vector<16x128xf32>
    %cst_5 = arith.constant 0.000000e+00 : f32
    %7 = vector.broadcast %cst_5 : f32 to vector<16x128xf32>
    %8 = arith.maximumf %6, %7 : vector<16x128xf32>
    %9 = arith.truncf %8 : vector<16x128xf32> to vector<16x128xbf16>
    %c0_6 = arith.constant 0 : index
    %c0_7 = arith.constant 0 : index
    %10 = vector.load %arg3[%c0_6, %c0_7] : memref<128x128xbf16, #tpu.memory_space<vmem>>, vector<128x128xbf16>
    %cst_8 = arith.constant dense<0.000000e+00> : vector<16x128xf32>
    %11 = tpu.matmul %9, %10, %cst_8 {dimension_numbers = #tpu.dot_dimension_numbers<[1], [0], [0], [1], [0, 0, 1, 1], [], []>} : vector<16x128xbf16>, vector<128x128xbf16>, vector<16x128xf32> -> vector<16x128xf32>
    %12 = vector.extract_strided_slice %1 {offsets = [1, 0], sizes = [1, 128], strides = [1, 1]} : vector<8x128xf32> to vector<1x128xf32>
    %13 = vector.broadcast %12 : vector<1x128xf32> to vector<16x128xf32>
    %14 = arith.addf %11, %13 : vector<16x128xf32>
    %cst_9 = arith.constant 0.000000e+00 : f32
    %15 = vector.broadcast %cst_9 : f32 to vector<16x128xf32>
    %16 = arith.maximumf %14, %15 : vector<16x128xf32>
    %17 = arith.truncf %16 : vector<16x128xf32> to vector<16x128xbf16>
    %c0_10 = arith.constant 0 : index
    %c0_11 = arith.constant 0 : index
    %18 = vector.load %arg4[%c0_10, %c0_11] : memref<128x128xbf16, #tpu.memory_space<vmem>>, vector<128x128xbf16>
    %cst_12 = arith.constant dense<0.000000e+00> : vector<16x128xf32>
    %19 = tpu.matmul %17, %18, %cst_12 {dimension_numbers = #tpu.dot_dimension_numbers<[1], [0], [0], [1], [0, 0, 1, 1], [], []>} : vector<16x128xbf16>, vector<128x128xbf16>, vector<16x128xf32> -> vector<16x128xf32>
    %20 = vector.extract_strided_slice %1 {offsets = [2, 0], sizes = [1, 128], strides = [1, 1]} : vector<8x128xf32> to vector<1x128xf32>
    %21 = vector.broadcast %20 : vector<1x128xf32> to vector<16x128xf32>
    %22 = arith.addf %19, %21 : vector<16x128xf32>
    %23 = tpu.iota {dimensions = array<i32: 1>} : vector<16x128xi32>
    %c16_i32 = arith.constant 16 : i32
    %24 = vector.broadcast %c16_i32 : i32 to vector<16x128xi32>
    %25 = arith.cmpi slt, %23, %24 : vector<16x128xi32>
    %cst_13 = arith.constant -1.000000e+30 : f32
    %26 = vector.broadcast %cst_13 : f32 to vector<16x128xf32>
    %27 = arith.select %25, %22, %26 : vector<16x128xi1>, vector<16x128xf32>
    %cst_14 = arith.constant dense<0xFF800000> : vector<16xf32>
    %28 = vector.multi_reduction <maximumf>, %27, %cst_14 [1] : vector<16x128xf32> to vector<16xf32>
    %29 = vector.shape_cast %28 : vector<16xf32> to vector<16x1xf32>
    %30 = vector.broadcast %29 : vector<16x1xf32> to vector<16x128xf32>
    %31 = arith.subf %27, %30 : vector<16x128xf32>
    %32 = math.exp %31 : vector<16x128xf32>
    %cst_15 = arith.constant 0.000000e+00 : f32
    %33 = vector.broadcast %cst_15 : f32 to vector<16x128xf32>
    %34 = arith.select %25, %32, %33 : vector<16x128xi1>, vector<16x128xf32>
    %cst_16 = arith.constant dense<0.000000e+00> : vector<16xf32>
    %35 = vector.multi_reduction <add>, %34, %cst_16 [1] : vector<16x128xf32> to vector<16xf32>
    %36 = vector.shape_cast %35 : vector<16xf32> to vector<16x1xf32>
    %37 = tpu.reciprocal %36 {approx = true} : vector<16x1xf32> -> vector<16x1xf32>
    %38 = vector.broadcast %37 : vector<16x1xf32> to vector<16x128xf32>
    %39 = arith.mulf %34, %38 : vector<16x128xf32>
    %c16_i32_17 = arith.constant 16 : i32
    %40 = vector.broadcast %c16_i32_17 : i32 to vector<16x128xi32>
    %41 = arith.cmpi eq, %23, %40 : vector<16x128xi32>
    %42 = arith.select %41, %22, %39 : vector<16x128xi1>, vector<16x128xf32>
    %c0_18 = arith.constant 0 : index
    %c0_19 = arith.constant 0 : index
    %43 = vector.load %arg6[%c0_18, %c0_19] : memref<16x128xf32, #tpu.memory_space<vmem>>, vector<16x128xf32>
    tpu.vector_store %arg6[%c0_18, %c0_19], %42 {strides = array<i32>} : memref<16x128xf32, #tpu.memory_space<vmem>>, vector<16x128xf32>,
    return
  }
  func.func @transform_0(%arg0: i32) -> (i32, i32) {
    %c0_i32 = arith.constant 0 : i32
    %c0_i32_0 = arith.constant 0 : i32
    return %arg0, %c0_i32 : i32, i32
  }
  func.func @transform_1(%arg0: i32) -> (i32, i32) {
    %c0_i32 = arith.constant 0 : i32
    %c0_i32_0 = arith.constant 0 : i32
    %c0_i32_1 = arith.constant 0 : i32
    return %c0_i32, %c0_i32_0 : i32, i32
  }
  func.func @transform_2(%arg0: i32) -> (i32, i32) {
    %c0_i32 = arith.constant 0 : i32
    %c0_i32_0 = arith.constant 0 : i32
    %c0_i32_1 = arith.constant 0 : i32
    return %c0_i32, %c0_i32_0 : i32, i32
  }
  func.func @transform_3(%arg0: i32) -> (i32, i32) {
    %c0_i32 = arith.constant 0 : i32
    %c0_i32_0 = arith.constant 0 : i32
    %c0_i32_1 = arith.constant 0 : i32
    return %c0_i32, %c0_i32_0 : i32, i32
  }
  func.func @transform_4(%arg0: i32) -> (i32, i32) {
    %c0_i32 = arith.constant 0 : i32
    %c0_i32_0 = arith.constant 0 : i32
    %c0_i32_1 = arith.constant 0 : i32
    return %c0_i32, %c0_i32_0 : i32, i32
  }
  func.func @transform_5(%arg0: i32) -> (i32, i32) {
    %c0_i32 = arith.constant 0 : i32
    %c0_i32_0 = arith.constant 0 : i32
    return %arg0, %c0_i32 : i32, i32
  }
}

</mosaic_0001>

<llo_original>
// kernel: worker_actor_critic_forward.1
$region0: #{worker_actor_critic_forward.1}
  #allocation0 [shape = 'u32[]', space=smem, size = 0x4, offset = 0x4, fixed_abs, tag = 'smem constant byte address 0x4 - core index']
  #allocation1 [shape = 'u32[72,128]{1,0:T(1,128)}', space=vmem, size = 0x9000, scoped, tag = 'internal scratch']
  %s0 = inlined_call_operand.vmem [shape: bf16[16,32], index: 0, kind: input, shape index: {}]
  %s1 = inlined_call_operand.vmem [shape: bf16[32,128], index: 1, kind: input, shape index: {}]
  %s2 = inlined_call_operand.hbm [shape: bf16[128,128], index: 2, kind: input, shape index: {}]
  %s3 = inlined_call_operand.hbm [shape: bf16[128,128], index: 3, kind: input, shape index: {}]
  %s4 = inlined_call_operand.vmem [shape: f32[8,128], index: 4, kind: input, shape index: {}]
  %s5 = inlined_call_operand.vmem [shape: f32[16,128], index: 5, kind: output, shape index: {}]
  %s6 = sld [smem:[#allocation0]]
  $region38: #{worker_actor_critic_forward.1} parent=0
    _
  %s8 = ssub.s32 1, %s6
  %s9 = scalar_select 0, %s8, %s6
  $region1: #{worker_actor_critic_forward.1} parent=0
    #allocation2 [shape = 'u8[32768]{0}', space=vmem, size = 0x8000, scoped, tag = 'input window, operand 2, single buffered']
    #allocation3 [shape = 's32[1]{0}', space=sflag, size = 0x4, scoped, tag = 'scoped memory for worker_actor_critic_forward.1']
    #allocation4 [shape = 'u8[32768]{0}', space=vmem, size = 0x8000, scoped, tag = 'input window, operand 3, single buffered']
    #allocation5 [shape = 's32[1]{0}', space=sflag, size = 0x4, scoped, tag = 'scoped memory for worker_actor_critic_forward.1']
    %10 = vsyncpa [#allocation3], 0
    %11 = vsyncpa [#allocation5], 0
    // Predicated region
    $region2: #{worker_actor_critic_forward.1} parent=1 // pred_check
      _
    $region3: #{worker_actor_critic_forward.1} parent=1 // pred_check_branch
      %13 = sbr.rel (0) target = $region5
    $region4: #{worker_actor_critic_forward.1} parent=1 // pred_region
      _
    $region5: #{worker_actor_critic_forward.1} parent=1 // pred_fallthru
      _
    // Predicated region
    $region6: #{worker_actor_critic_forward.1} parent=1 // pred_check
      _
    $region7: #{worker_actor_critic_forward.1} parent=1 // pred_check_branch
      %15 = sbr.rel (0) target = $region9
    $region8: #{worker_actor_critic_forward.1} parent=1 // pred_region
      _
    $region9: #{worker_actor_critic_forward.1} parent=1 // pred_fallthru
      _
    // Predicated region
    $region10: #{worker_actor_critic_forward.1} parent=1 // pred_check
      _
    $region11: #{worker_actor_critic_forward.1} parent=1 // pred_check_branch
      %17 = sbr.rel (0) target = $region13
    $region12: #{worker_actor_critic_forward.1} parent=1 // pred_region
      %19 = vsyncadd [#allocation3], 0
      %s20 = sshll.u32 %s2, 4
      %s21 = int_to_ptr.hbm [resolvable:$true] %s20
      %s22 = sshll.u32 [#allocation2], 4
      %s23 = int_to_ptr.vmem [resolvable:$true] %s22
      %28 = dma.hbm_to_vmem [thread:$0]  %s21, 1024, %s23, [#allocation3], 64, 64, 4
    $region13: #{worker_actor_critic_forward.1} parent=1 // pred_fallthru
      _
    // Predicated region
    $region14: #{worker_actor_critic_forward.1} parent=1 // pred_check
      _
    $region15: #{worker_actor_critic_forward.1} parent=1 // pred_check_branch
      %30 = sbr.rel (0) target = $region17
    $region16: #{worker_actor_critic_forward.1} parent=1 // pred_region
      %32 = vsyncadd [#allocation5], 0
      %s33 = sshll.u32 %s3, 4
      %s34 = int_to_ptr.hbm [resolvable:$true] %s33
      %s35 = sshll.u32 [#allocation4], 4
      %s36 = int_to_ptr.vmem [resolvable:$true] %s35
      %41 = dma.hbm_to_vmem [thread:$0]  %s34, 1024, %s36, [#allocation5], 64, 64, 4
    $region17: #{worker_actor_critic_forward.1} parent=1 // pred_fallthru
      _
    // Predicated region
    $region18: #{worker_actor_critic_forward.1} parent=1 // pred_check
      _
    $region19: #{worker_actor_critic_forward.1} parent=1 // pred_check_branch
      %43 = sbr.rel (0) target = $region21
    $region20: #{worker_actor_critic_forward.1} parent=1 // pred_region
      _
    $region21: #{worker_actor_critic_forward.1} parent=1 // pred_fallthru
      _
    // Predicated region
    $region22: #{worker_actor_critic_forward.1} parent=1 // pred_check
      _
    $region23: #{worker_actor_critic_forward.1} parent=1 // pred_check_branch
      %45 = sbr.rel (0) target = $region25
    $region24: #{worker_actor_critic_forward.1} parent=1 // pred_region
      %47 = dma.done [#allocation3], 1024
    $region25: #{worker_actor_critic_forward.1} parent=1 // pred_fallthru
      _
    // Predicated region
    $region26: #{worker_actor_critic_forward.1} parent=1 // pred_check
      _
    $region27: #{worker_actor_critic_forward.1} parent=1 // pred_check_branch
      %49 = sbr.rel (0) target = $region29
    $region28: #{worker_actor_critic_forward.1} parent=1 // pred_region
      %51 = dma.done [#allocation5], 1024
    $region29: #{worker_actor_critic_forward.1} parent=1 // pred_fallthru
      _
    %v53 = vld [vmem:[%s0] sm:$0xf]
    %v54 = vld [vmem:[%s0 + $0x4] sm:$0xf]
    %v55 = vld [vmem:[%s4] sm:$0xff]
    %v56 = vld [vmem:[%s1] sm:$0xf]
    %v57 = vld [vmem:[%s1 + $0x4] sm:$0xf]
    %v58 = vld [vmem:[%s1 + $0x8] sm:$0xf]
    %v59 = vld [vmem:[%s1 + $0xc] sm:$0xf]
    %v60 = vperm.slane %v55, 0
    %v63 = vunpack.c.l.b16 %v53
    %v64 = vunpack.c.l.b16 %v54
    %v65 = vpack.c.b16 %v64, %v63
    %v70 = vunpack.c.l.b16 %v56
    %v71 = vunpack.c.l.b16 %v57
    %v72 = vunpack.c.l.b16 %v58
    %v73 = vunpack.c.l.b16 %v59
    %v74 = vpack.c.b16 %v71, %v70
    %v75 = vpack.c.b16 %v73, %v72
    %vm78 = vcmask 261120
    %v80 = vsel %vm78, %v65, 0
    %82 = vmatpush.bf16.msra.mxu0 0
    %83 = vmatpush.bf16.msra.mxu0 0
    %84 = vmatpush.bf16.msra.mxu0 0
    %85 = vmatpush.bf16.msra.mxu0 0
    %86 = vmatpush.bf16.msra.mxu0 0
    %87 = vmatpush.bf16.msra.mxu0 0
    %88 = vmatpush.bf16.msra.mxu0 %v75
    %89 = vmatpush.bf16.msra.mxu0 %v74
    %90 = vmatmul.bf16.gmra.mxu0 %v80
    %v91 = vpop.f32.mrf.mxu0
    %v92 = vadd.f32 %v60, %v91
    %v93 = vpop.f32.mrf.mxu0
    %v94 = vadd.f32 %v60, %v93
    %95 = vdwg.mxu0
    %v96 = vmax.f32 %v92, 0.0
    %v97 = vmax.f32 %v94, 0.0
    %v98 = vpack.c.bf16 %v97, %v96
    %v99 = vld [vmem:[#allocation2] sm:$0xf]
    %v100 = vld [vmem:[#allocation2 + $0x4] sm:$0xf]
    %v101 = vld [vmem:[#allocation2 + $0x8] sm:$0xf]
    %v102 = vld [vmem:[#allocation2 + $0xc] sm:$0xf]
    %v103 = vld [vmem:[#allocation2 + $0x10] sm:$0xf]
    %v104 = vld [vmem:[#allocation2 + $0x14] sm:$0xf]
    %v105 = vld [vmem:[#allocation2 + $0x18] sm:$0xf]
    %v106 = vld [vmem:[#allocation2 + $0x1c] sm:$0xf]
    %v107 = vld [vmem:[#allocation2 + $0x20] sm:$0xf]
    %v108 = vld [vmem:[#allocation2 + $0x24] sm:$0xf]
    %v109 = vld [vmem:[#allocation2 + $0x28] sm:$0xf]
    %v110 = vld [vmem:[#allocation2 + $0x2c] sm:$0xf]
    %v111 = vld [vmem:[#allocation2 + $0x30] sm:$0xf]
    %v112 = vld [vmem:[#allocation2 + $0x34] sm:$0xf]
    %v113 = vld [vmem:[#allocation2 + $0x38] sm:$0xf]
    %v114 = vld [vmem:[#allocation2 + $0x3c] sm:$0xf]
    %v115 = vperm.slane %v55, 1
    %v132 = vunpack.c.l.b16 %v99
    %v133 = vunpack.c.l.b16 %v100
    %v134 = vunpack.c.l.b16 %v101
    %v135 = vunpack.c.l.b16 %v102
    %v136 = vunpack.c.l.b16 %v103
    %v137 = vunpack.c.l.b16 %v104
    %v138 = vunpack.c.l.b16 %v105
    %v139 = vunpack.c.l.b16 %v106
    %v140 = vunpack.c.l.b16 %v107
    %v141 = vunpack.c.l.b16 %v108
    %v142 = vunpack.c.l.b16 %v109
    %v143 = vunpack.c.l.b16 %v110
    %v144 = vunpack.c.l.b16 %v111
    %v145 = vunpack.c.l.b16 %v112
    %v146 = vunpack.c.l.b16 %v113
    %v147 = vunpack.c.l.b16 %v114
    %v148 = vpack.c.b16 %v133, %v132
    %v149 = vpack.c.b16 %v135, %v134
    %v150 = vpack.c.b16 %v137, %v136
    %v151 = vpack.c.b16 %v139, %v138
    %v152 = vpack.c.b16 %v141, %v140
    %v153 = vpack.c.b16 %v143, %v142
    %v154 = vpack.c.b16 %v145, %v144
    %v155 = vpack.c.b16 %v147, %v146
    %164 = vmatpush.bf16.msra.mxu0 %v155
    %165 = vmatpush.bf16.msra.mxu0 %v154
    %166 = vmatpush.bf16.msra.mxu0 %v153
    %167 = vmatpush.bf16.msra.mxu0 %v152
    %168 = vmatpush.bf16.msra.mxu0 %v151
    %169 = vmatpush.bf16.msra.mxu0 %v150
    %170 = vmatpush.bf16.msra.mxu0 %v149
    %171 = vmatpush.bf16.msra.mxu0 %v148
    %172 = vmatmul.bf16.gmra.mxu0 %v98
    %v173 = vpop.f32.mrf.mxu0
    %v174 = vadd.f32 %v115, %v173
    %v175 = vpop.f32.mrf.mxu0
    %v176 = vadd.f32 %v115, %v175
    %177 = vdwg.mxu0
    %v178 = vmax.f32 %v174, 0.0
    %v179 = vmax.f32 %v176, 0.0
    %v180 = vpack.c.bf16 %v179, %v178
    %v181 = vld [vmem:[#allocation4] sm:$0xf]
    %v182 = vld [vmem:[#allocation4 + $0x4] sm:$0xf]
    %v183 = vld [vmem:[#allocation4 + $0x8] sm:$0xf]
    %v184 = vld [vmem:[#allocation4 + $0xc] sm:$0xf]
    %v185 = vld [vmem:[#allocation4 + $0x10] sm:$0xf]
    %v186 = vld [vmem:[#allocation4 + $0x14] sm:$0xf]
    %v187 = vld [vmem:[#allocation4 + $0x18] sm:$0xf]
    %v188 = vld [vmem:[#allocation4 + $0x1c] sm:$0xf]
    %v189 = vld [vmem:[#allocation4 + $0x20] sm:$0xf]
    %v190 = vld [vmem:[#allocation4 + $0x24] sm:$0xf]
    %v191 = vld [vmem:[#allocation4 + $0x28] sm:$0xf]
    %v192 = vld [vmem:[#allocation4 + $0x2c] sm:$0xf]
    %v193 = vld [vmem:[#allocation4 + $0x30] sm:$0xf]
    %v194 = vld [vmem:[#allocation4 + $0x34] sm:$0xf]
    %v195 = vld [vmem:[#allocation4 + $0x38] sm:$0xf]
    %v196 = vld [vmem:[#allocation4 + $0x3c] sm:$0xf]
    %v197 = vperm.slane %v55, 2
    %v214 = vunpack.c.l.b16 %v181
    %v215 = vunpack.c.l.b16 %v182
    %v216 = vunpack.c.l.b16 %v183
    %v217 = vunpack.c.l.b16 %v184
    %v218 = vunpack.c.l.b16 %v185
    %v219 = vunpack.c.l.b16 %v186
    %v220 = vunpack.c.l.b16 %v187
    %v221 = vunpack.c.l.b16 %v188
    %v222 = vunpack.c.l.b16 %v189
    %v223 = vunpack.c.l.b16 %v190
    %v224 = vunpack.c.l.b16 %v191
    %v225 = vunpack.c.l.b16 %v192
    %v226 = vunpack.c.l.b16 %v193
    %v227 = vunpack.c.l.b16 %v194
    %v228 = vunpack.c.l.b16 %v195
    %v229 = vunpack.c.l.b16 %v196
    %v230 = vpack.c.b16 %v215, %v214
    %v231 = vpack.c.b16 %v217, %v216
    %v232 = vpack.c.b16 %v219, %v218
    %v233 = vpack.c.b16 %v221, %v220
    %v234 = vpack.c.b16 %v223, %v222
    %v235 = vpack.c.b16 %v225, %v224
    %v236 = vpack.c.b16 %v227, %v226
    %v237 = vpack.c.b16 %v229, %v228
    %246 = vmatpush.bf16.msra.mxu0 %v237
    %247 = vmatpush.bf16.msra.mxu0 %v236
    %248 = vmatpush.bf16.msra.mxu0 %v235
    %249 = vmatpush.bf16.msra.mxu0 %v234
    %250 = vmatpush.bf16.msra.mxu0 %v233
    %251 = vmatpush.bf16.msra.mxu0 %v232
    %252 = vmatpush.bf16.msra.mxu0 %v231
    %253 = vmatpush.bf16.msra.mxu0 %v230
    %254 = vmatmul.bf16.gmra.mxu0 %v180
    %v255 = vpop.f32.mrf.mxu0
    %v256 = vadd.f32 %v197, %v255
    %v257 = vpop.f32.mrf.mxu0
    %v258 = vadd.f32 %v197, %v257
    %259 = vdwg.mxu0
    %v260 = vlaneseq
    %v261 = vand.u32 %v260, 127
    %vm262 = vcmp.lt.s32.totalorder %v261, 16
    %v263 = vsel %vm262, %v256, -1e+30
    %v264 = vsel %vm262, %v258, -1e+30
    %265 = vmax.xlane.f32.xlu0 %v263
    %v266 = vpop.xlane.xlu0 %265
    %267 = vmax.xlane.f32.xlu0 %v264
    %v268 = vpop.xlane.xlu0 %267
    %v269 = vsub.f32 %v263, %v266
    %v270 = vsub.f32 %v264, %v268
    %v271 = vmul.f32 %v269, 1.442695
    %v272 = vpow.pop %v271
    %v273 = vmul.f32 %v270, 1.442695
    %v274 = vpow.pop %v273
    %v275 = vsel %vm262, %v272, 0.0
    %v276 = vsel %vm262, %v274, 0.0
    %277 = vadd.xlane.f32.xlu0 %v275
    %v278 = vpop.xlane.xlu0 %277
    %279 = vadd.xlane.f32.xlu0 %v276
    %v280 = vpop.xlane.xlu0 %279
    %v281 = vrcp.pop %v278
    %v282 = vrcp.pop %v280
    %v283 = vmul.f32 %v275, %v281
    %v284 = vmul.f32 %v276, %v282
    %vm285 = vcmp.eq.s32.totalorder %v261, 16
    %v286 = vsel %vm285, %v256, %v283
    %v287 = vsel %vm285, %v258, %v284
    %288 = vst [vmem:[%s5] sm:$0xff] %v286
    %289 = vst [vmem:[%s5 + $0x8] sm:$0xff] %v287
    // Predicated region
    $region30: #{worker_actor_critic_forward.1} parent=1 // pred_check
      _
    $region31: #{worker_actor_critic_forward.1} parent=1 // pred_check_branch
      %291 = sbr.rel (0) target = $region33
    $region32: #{worker_actor_critic_forward.1} parent=1 // pred_region
      _
    $region33: #{worker_actor_critic_forward.1} parent=1 // pred_fallthru
      _
    // Predicated region
    $region34: #{worker_actor_critic_forward.1} parent=1 // pred_check
      _
    $region35: #{worker_actor_critic_forward.1} parent=1 // pred_check_branch
      %293 = sbr.rel (0) target = $region37
    $region36: #{worker_actor_critic_forward.1} parent=1 // pred_region
      _
    $region37: #{worker_actor_critic_forward.1} parent=1 // pred_fallthru
      _
    %294 = vsyncpa [#allocation3], 1
    %295 = vsyncpa [#allocation5], 1

</llo_original>
